<compile_context>
chip_gen: v6e
topology: v6e:2x2x1
jax: 0.10.0
libtpu: 0.0.40
codegen_flags: <defaults>
</compile_context>

<pallas_src>
import functools

import jax
import jax.numpy as jnp
from jax.experimental import pallas as pl
from jax.experimental.pallas import tpu as pltpu


_VMEM_LIMIT = 32 * 1024 * 1024     # scoped-VMEM request, <= physical on v5e/v6e/v7x
_BUF_BUDGET = 4 * 1024 * 1024      # ~4 MiB per pipeline buffer (x2 double-buffered)
_MAX_ROWS = 2048                   # amortizes ~0.35 us/grid-step overhead


# ----------------------------------------------------------------------------
# Kernels
# ----------------------------------------------------------------------------
def _row_entropy(logits):
    """Shannon entropy of softmax(logits) per row.  logits: (tb, C) -> (tb, 1).

    H = log(s) - sum(e * shifted) / s   with  shifted = logits - max,
    e = exp(shifted), s = sum(e).  Avoids materializing prob / log_prob
    (one fewer (tb, C) subtract and one fewer (tb, C) divide).
    """
    m = jnp.max(logits, axis=-1, keepdims=True)
    shifted = logits - m
    e = jnp.exp(shifted)
    s = jnp.sum(e, axis=-1, keepdims=True)
    es = jnp.sum(e * shifted, axis=-1, keepdims=True)
    return jnp.log(s) - es / s


def _entropy_reduce_kernel(x_ref, o_ref, acc_ref, *, n_rows, denom, mask_last):
    """Classification entropy, reduction='mean'/'sum'.

    acc_ref: (tb, 1) f32 VMEM scratch, resident across the grid.
    o_ref:   (1, 1)  written once at the last step.
    """
    i = pl.program_id(0)
    nb = pl.num_programs(0)

    @pl.when(i == 0)
    def _init():
        acc_ref[...] = jnp.zeros_like(acc_ref)

    ent = _row_entropy(x_ref[...].astype(jnp.float32))              # (tb, 1)

    if mask_last:
        @pl.when(i < nb - 1)
        def _body_fast():                                           # unmasked fast path
            acc_ref[...] += ent

        @pl.when(i == nb - 1)
        def _body_masked():                                         # only last block pays the mask
            tb = ent.shape[0]
            row = i * tb + jax.lax.broadcasted_iota(jnp.int32, ent.shape, 0)
            acc_ref[...] += jnp.where(row < n_rows, ent, 0.0)
    else:
        acc_ref[...] += ent

    @pl.when(i == nb - 1)
    def _finalize():
        o_ref[...] = jnp.sum(acc_ref[...], axis=0, keepdims=True) * (1.0 / denom)


def _masked_sum_kernel(x_ref, o_ref, acc_ref, *, n_rows, denom, mask_last):
    """Regression log_sigma_sq, reduction='mean'/'sum'.  Same accumulator layout."""
    i = pl.program_id(0)
    nb = pl.num_programs(0)

    @pl.when(i == 0)
    def _init():
        acc_ref[...] = jnp.zeros_like(acc_ref)

    x = x_ref[...].astype(jnp.float32)                              # (tb, W)
    partial = jnp.sum(x, axis=-1, keepdims=True)                    # (tb, 1)

    if mask_last:
        @pl.when(i < nb - 1)
        def _body_fast():
            acc_ref[...] += partial

        @pl.when(i == nb - 1)
        def _body_masked():
            tb = partial.shape[0]
            row = i * tb + jax.lax.broadcasted_iota(jnp.int32, partial.shape, 0)
            acc_ref[...] += jnp.where(row < n_rows, partial, 0.0)
    else:
        acc_ref[...] += partial

    @pl.when(i == nb - 1)
    def _finalize():
        o_ref[...] = jnp.sum(acc_ref[...], axis=0, keepdims=True) * (1.0 / denom)


def _entropy_per_sample_kernel(x_ref, o_ref):
    """Classification entropy, reduction='none'.  o_ref: (tb, 1) per step.

    Boundary-block garbage rows produce garbage entropies, but Pallas discards
    the out-of-bounds part of the output block write, so they never land.
    """
    o_ref[...] = _row_entropy(x_ref[...].astype(jnp.float32))


# ----------------------------------------------------------------------------
# Tiling / wrapper
# ----------------------------------------------------------------------------
def _round_up(v, m):
    return ((v + m - 1) // m) * m


def _tile_rows(n, c, itemsize):
    """Row tile: multiple of the dtype's sublane tile, sized so one input
    pipeline buffer is ~_BUF_BUDGET bytes, capped at _MAX_ROWS and at the
    (sublane-rounded) batch size."""
    itemsize = int(itemsize)
    sub = max(8, 32 // max(itemsize, 1))          # 8 f32 / 16 bf16 / 32 int8-fp8
    rows = _BUF_BUDGET // max(1, c * itemsize)
    rows = min(rows, _MAX_ROWS, _round_up(n, sub))
    rows = max(sub, (rows // sub) * sub)
    return rows
    # NOTE: if one (sub, C) block exceeds VMEM (vocab-scale C), a lane-axis
    # grid with an online (max, sum-exp) accumulator would be needed.


def _reduce_call(x, kernel_fn, denom):
    """Run a scalar-reduction kernel over an (R, W) array."""
    r, w = x.shape
    tb = _tile_rows(r, w, jnp.dtype(x.dtype).itemsize)
    nb = pl.cdiv(r, tb)
    kernel = functools.partial(kernel_fn, n_rows=r, denom=float(denom),
                               mask_last=(r % tb != 0))
    out = pl.pallas_call(
        kernel,
        out_shape=jax.ShapeDtypeStruct((1, 1), jnp.float32),
        grid=(nb,),
        in_specs=[pl.BlockSpec((tb, w), lambda i: (i, 0))],
        out_specs=pl.BlockSpec((1, 1), lambda i: (0, 0)),     # resident scalar tile
        scratch_shapes=[pltpu.VMEM((tb, 1), jnp.float32)],    # per-row partial acc
        compiler_params=pltpu.CompilerParams(
            dimension_semantics=("arbitrary",),               # reduction axis
            vmem_limit_bytes=_VMEM_LIMIT),
    )(x)
    return out[0, 0]


def entropy_minimization_loss(inputs, *, task_type="classification",
                              reduction="mean"):
    """Forward pass of EntropyMinimizationLoss.

    classification: inputs = logits (N, C);  regression: inputs = log_sigma_sq (N, D).
    """
    if task_type not in ("classification", "regression"):
        raise ValueError(f"Unsupported task_type: '{task_type}'.")
    if reduction not in ("mean", "sum", "none"):
        raise ValueError(f"Reduction method '{reduction}' not supported.")

    x = jnp.asarray(inputs)
    assert x.ndim == 2, "expected (N, C) / (N, D) inputs"
    n, c = x.shape

    if task_type == "regression":
        if reduction == "none":
            # Per-element term IS the input; identity, no kernel needed.
            return x
        # Lane-dense slab for D << 128: free reshape when N*D divides a lane
        # multiple (otherwise fall back to the (N, D) layout + last-block mask).
        xr = x
        if c % 128 != 0:
            total = n * c
            for w in (1024, 512, 256, 128):
                if total % w == 0:
                    xr = x.reshape(total // w, w)
                    break
        denom = float(n * c) if reduction == "mean" else 1.0
        return _reduce_call(xr, _masked_sum_kernel, denom)

    # ---- classification ----
    if reduction == "none":
        tb = _tile_rows(n, c, jnp.dtype(x.dtype).itemsize)
        out = pl.pallas_call(
            _entropy_per_sample_kernel,
            out_shape=jax.ShapeDtypeStruct((n, 1), jnp.float32),
            grid=(pl.cdiv(n, tb),),
            in_specs=[pl.BlockSpec((tb, c), lambda i: (i, 0))],
            out_specs=pl.BlockSpec((tb, 1), lambda i: (i, 0)),
            compiler_params=pltpu.CompilerParams(
                dimension_semantics=("parallel",),
                vmem_limit_bytes=_VMEM_LIMIT),
        )(x)
        return out[:, 0]

    denom = float(n) if reduction == "mean" else 1.0
    return _reduce_call(x, _entropy_reduce_kernel, denom)


# ----------------------------------------------------------------------------
# Pure-JAX reference + self-test
# ----------------------------------------------------------------------------
def _reference(inputs, task_type, reduction):
    if task_type == "classification":
        log_prob = jax.nn.log_softmax(inputs, axis=-1)
        per = -(jnp.exp(log_prob) * log_prob).sum(axis=-1)
    else:
        per = inputs
    if reduction == "mean":
        return per.mean()
    if reduction == "sum":
        return per.sum()
    return per


if __name__ == "__main__":
    key = jax.random.PRNGKey(0)
    k1, k2, k3, k4 = jax.random.split(key, 4)

    # Small shapes consistent with the module's forward:
    logits = jax.random.normal(k1, (16, 32), jnp.float32) * 2.0      # (N, C)
    log_sigma_sq = jax.random.normal(k2, (16, 8), jnp.float32)       # (N, D) -> lane-packed
    ragged_logits = jax.random.normal(k3, (13, 10), jnp.float32)     # non-multiple-of-8 N
    ragged_sigma = jax.random.normal(k4, (13, 10), jnp.float32)      # non-flattenable regression

    cases = (
        ("classification", logits, ("mean", "sum", "none")),
        ("regression", log_sigma_sq, ("mean", "sum", "none")),
        ("classification", ragged_logits, ("mean", "sum", "none")),  # boundary-block masking
        ("regression", ragged_sigma, ("mean", "sum")),               # fallback (N, D) path
    )
    for task, xin, reductions in cases:
        for red in reductions:
            got = jax.block_until_ready(
                entropy_minimization_loss(xin, task_type=task, reduction=red))
            want = _reference(xin, task, red)
            assert got.shape == jnp.asarray(want).shape, (task, red, got.shape)
            assert jnp.allclose(got, want, atol=1e-5, rtol=1e-5), (task, red, got, want)

    print("KERNEL_OK")
</pallas_src>

<mosaic_0001>
module attributes {stable_mosaic.version = 11 : i64} {
  func.func @_entropy_reduce_kernel(%arg0: i32, %arg1: memref<16x32xf32, #tpu.memory_space<vmem>>, %arg2: memref<1x1xf32, #tpu.memory_space<vmem>>, %arg3: memref<16x1xf32, #tpu.memory_space<vmem>>) attributes {dimension_semantics = [#tpu.dimension_semantics<arbitrary>], iteration_bounds = array<i64: 1>, scalar_prefetch = 0 : i64, scratch_operands = 1 : i64, tpu.core_type = #tpu.core_type<tc>, window_params = [{transform_indices = @transform_0, window_bounds = array<i64: 16, 32>}, {pipeline_mode = #tpu.pipeline_mode<synchronous>, transform_indices = @transform_1, window_bounds = array<i64: 1, 1>}]} {
    %c0_i32 = arith.constant 0 : i32
    %0 = arith.cmpi eq, %arg0, %c0_i32 : i32
    %1 = arith.extui %0 : i1 to i32
    %c0_i32_0 = arith.constant 0 : i32
    %2 = arith.cmpi ne, %1, %c0_i32_0 : i32
    scf.if %2 {
      %cst_10 = arith.constant 0.000000e+00 : f32
      %23 = vector.broadcast %cst_10 : f32 to vector<16x1xf32>
      %c0_11 = arith.constant 0 : index
      %c0_12 = arith.constant 0 : index
      %24 = vector.load %arg3[%c0_11, %c0_12] : memref<16x1xf32, #tpu.memory_space<vmem>>, vector<16x1xf32>
      tpu.vector_store %arg3[%c0_11, %c0_12], %23 {strides = array<i32>} : memref<16x1xf32, #tpu.memory_space<vmem>>, vector<16x1xf32>,
    } else {
    }
    %c0 = arith.constant 0 : index
    %c0_1 = arith.constant 0 : index
    %3 = vector.load %arg1[%c0, %c0_1] : memref<16x32xf32, #tpu.memory_space<vmem>>, vector<16x32xf32>
    %cst = arith.constant dense<0xFF800000> : vector<16xf32>
    %4 = vector.multi_reduction <maximumf>, %3, %cst [1] : vector<16x32xf32> to vector<16xf32>
    %5 = vector.shape_cast %4 : vector<16xf32> to vector<16x1xf32>
    %6 = vector.broadcast %5 : vector<16x1xf32> to vector<16x32xf32>
    %7 = arith.subf %3, %6 : vector<16x32xf32>
    %8 = math.exp %7 : vector<16x32xf32>
    %cst_2 = arith.constant dense<0.000000e+00> : vector<16xf32>
    %9 = vector.multi_reduction <add>, %8, %cst_2 [1] : vector<16x32xf32> to vector<16xf32>
    %10 = vector.shape_cast %9 : vector<16xf32> to vector<16x1xf32>
    %11 = arith.mulf %8, %7 : vector<16x32xf32>
    %cst_3 = arith.constant dense<0.000000e+00> : vector<16xf32>
    %12 = vector.multi_reduction <add>, %11, %cst_3 [1] : vector<16x32xf32> to vector<16xf32>
    %13 = vector.shape_cast %12 : vector<16xf32> to vector<16x1xf32>
    %14 = math.log %10 : vector<16x1xf32>
    %15 = arith.divf %13, %10 : vector<16x1xf32>
    %16 = arith.subf %14, %15 : vector<16x1xf32>
    %c0_4 = arith.constant 0 : index
    %c0_5 = arith.constant 0 : index
    %17 = vector.load %arg3[%c0_4, %c0_5] : memref<16x1xf32, #tpu.memory_space<vmem>>, vector<16x1xf32>
    %18 = arith.addf %17, %16 : vector<16x1xf32>
    %c0_6 = arith.constant 0 : index
    %c0_7 = arith.constant 0 : index
    %19 = vector.load %arg3[%c0_6, %c0_7] : memref<16x1xf32, #tpu.memory_space<vmem>>, vector<16x1xf32>
    tpu.vector_store %arg3[%c0_6, %c0_7], %18 {strides = array<i32>} : memref<16x1xf32, #tpu.memory_space<vmem>>, vector<16x1xf32>,
    %c0_i32_8 = arith.constant 0 : i32
    %20 = arith.cmpi eq, %arg0, %c0_i32_8 : i32
    %21 = arith.extui %20 : i1 to i32
    %c0_i32_9 = arith.constant 0 : i32
    %22 = arith.cmpi ne, %21, %c0_i32_9 : i32
    scf.if %22 {
      %c0_10 = arith.constant 0 : index
      %c0_11 = arith.constant 0 : index
      %23 = vector.load %arg3[%c0_10, %c0_11] : memref<16x1xf32, #tpu.memory_space<vmem>>, vector<16x1xf32>
      %cst_12 = arith.constant dense<0.000000e+00> : vector<1xf32>
      %24 = vector.multi_reduction <add>, %23, %cst_12 [0] : vector<16x1xf32> to vector<1xf32>
      %25 = vector.shape_cast %24 : vector<1xf32> to vector<1x1xf32>
      %cst_13 = arith.constant 6.250000e-02 : f32
      %26 = vector.broadcast %cst_13 : f32 to vector<1x1xf32>
      %27 = arith.mulf %25, %26 : vector<1x1xf32>
      %c0_14 = arith.constant 0 : index
      %c0_15 = arith.constant 0 : index
      %28 = vector.load %arg2[%c0_14, %c0_15] : memref<1x1xf32, #tpu.memory_space<vmem>>, vector<1x1xf32>
      tpu.vector_store %arg2[%c0_14, %c0_15], %27 {strides = array<i32>} : memref<1x1xf32, #tpu.memory_space<vmem>>, vector<1x1xf32>,
    } else {
    }
    return
  }
  func.func @transform_0(%arg0: i32) -> (i32, i32) {
    %c0_i32 = arith.constant 0 : i32
    %c0_i32_0 = arith.constant 0 : i32
    return %arg0, %c0_i32 : i32, i32
  }
  func.func @transform_1(%arg0: i32) -> (i32, i32) {
    %c0_i32 = arith.constant 0 : i32
    %c0_i32_0 = arith.constant 0 : i32
    %c0_i32_1 = arith.constant 0 : i32
    return %c0_i32, %c0_i32_0 : i32, i32
  }
}

</mosaic_0001>

<llo_original>
// kernel: tpu_custom_call.1
$region0: #{tpu_custom_call.1}
  #allocation0 [shape = 'u32[]', space=smem, size = 0x4, offset = 0x4, fixed_abs, tag = 'smem constant byte address 0x4 - core index']
  #allocation1 [shape = 'u32[144,128]{1,0:T(1,128)}', space=vmem, size = 0x12000, scoped, tag = 'internal scratch']
  #allocation2 [shape = 'f32[16,1]{1,0:T(8,128)}', space=vmem, size = 0x2000, scoped, tag = 'scratch operand']
  %s0 = inlined_call_operand.hbm [shape: f32[16,32], index: 0, kind: input, shape index: {}]
  %s1 = inlined_call_operand.hbm [shape: f32[1,1], index: 1, kind: output, shape index: {}]
  %s2 = sld [smem:[#allocation0]]
  $region26: #{tpu_custom_call.1} parent=0
    _
  %s4 = ssub.s32 1, %s2
  %s5 = scalar_select 0, %s4, %s2
  $region1: #{tpu_custom_call.1} parent=0
    #allocation3 [shape = 'u8[8192]{0}', space=vmem, size = 0x2000, scoped, tag = 'input window, operand 0, single buffered']
    #allocation4 [shape = 's32[1]{0}', space=sflag, size = 0x4, scoped, tag = 'scoped memory for tpu_custom_call.1']
    #allocation5 [shape = 's32[1]{0}', space=sflag, size = 0x4, scoped, tag = 'scoped memory for tpu_custom_call.1']
    #allocation6 [shape = 'u8[512]{0}', space=vmem, size = 0x400, scoped, tag = 'output window, operand 0, single buffered']
    %6 = vsyncpa [#allocation4], 0
    %7 = vsyncpa [#allocation5], 0
    // Predicated region
    $region2: #{tpu_custom_call.1} parent=1 // pred_check
      _
    $region3: #{tpu_custom_call.1} parent=1 // pred_check_branch
      %9 = sbr.rel (0) target = $region5
    $region4: #{tpu_custom_call.1} parent=1 // pred_region
      %s11 = ssub.s32 256, 256
      %12 = vsyncadd [#allocation4], %s11
      %s13 = sshll.u32 [#allocation3], 4
      %s14 = int_to_ptr.vmem [resolvable:$true] %s13
      %19 = dma.hbm_to_vmem [thread:$0]  %s0, 256, %s14, [#allocation4], 128, 128, 8
    $region5: #{tpu_custom_call.1} parent=1 // pred_fallthru
      _
    // Predicated region
    $region6: #{tpu_custom_call.1} parent=1 // pred_check
      _
    $region7: #{tpu_custom_call.1} parent=1 // pred_check_branch
      %21 = sbr.rel (0) target = $region9
    $region8: #{tpu_custom_call.1} parent=1 // pred_region
      %22 = dma.done [#allocation4], 256
    $region9: #{tpu_custom_call.1} parent=1 // pred_fallthru
      _
    %p23 = scmp.eq.s32.totalorder 0, 0
    // Predicated region
    $region10: #{tpu_custom_call.1} parent=1 // pred_check
      %p24 = pneg %p23
    $region11: #{tpu_custom_call.1} parent=1 // pred_check_branch
      %26 = sbr.rel (%p24) target = $region13
    $region12: #{tpu_custom_call.1} parent=1 // pred_region
      %vm27 = vcmask 7168
      %28 = vst.msk [vmem:[#allocation2] sm:$0xff] %vm27, 0.0
      %29 = vst.msk [vmem:[#allocation2 + $0x8] sm:$0xff] %vm27, 0.0
    $region13: #{tpu_custom_call.1} parent=1 // pred_fallthru
      _
    %v30 = vld [vmem:[#allocation3] sm:$0xff]
    %v31 = vld [vmem:[#allocation3 + $0x8] sm:$0xff]
    %vm32 = vcmask 261120
    %v33 = vsel %vm32, %v30, -inf
    %34 = vmax.xlane.f32.xlu0 %v33
    %v35 = vpop.xlane.xlu0 %34
    %v36 = vsel %vm32, %v31, -inf
    %37 = vmax.xlane.f32.xlu0 %v36
    %v38 = vpop.xlane.xlu0 %37
    %v39 = vsub.f32 %v30, %v35
    %v40 = vsub.f32 %v31, %v38
    %v41 = vmul.f32 %v39, 1.442695
    %v42 = vpow.pop %v41
    %v43 = vmul.f32 %v40, 1.442695
    %v44 = vpow.pop %v43
    %v45 = vsel %vm32, %v42, 0.0
    %46 = vadd.xlane.f32.xlu0 %v45
    %v47 = vpop.xlane.xlu0 %46
    %v48 = vsel %vm32, %v44, 0.0
    %49 = vadd.xlane.f32.xlu0 %v48
    %v50 = vpop.xlane.xlu0 %49
    %v51 = vmul.f32 %v42, %v39
    %v52 = vmul.f32 %v44, %v40
    %v53 = vsel %vm32, %v51, 0.0
    %54 = vadd.xlane.f32.xlu0 %v53
    %v55 = vpop.xlane.xlu0 %54
    %v56 = vsel %vm32, %v52, 0.0
    %57 = vadd.xlane.f32.xlu0 %v56
    %v58 = vpop.xlane.xlu0 %57
    %v59 = vlog2.pop %v47
    %v60 = vmul.f32 %v59, 0.6931472
    %v61 = vlog2.pop %v50
    %v62 = vmul.f32 %v61, 0.6931472
    %v63 = vrcp.pop %v47
    %v64 = vmul.f32 %v55, %v63
    %v65 = vrcp.pop %v50
    %v66 = vmul.f32 %v58, %v65
    %v67 = vsub.f32 %v60, %v64
    %v68 = vsub.f32 %v62, %v66
    %v69 = vld [vmem:[#allocation2] sm:$0xff]
    %v70 = vld [vmem:[#allocation2 + $0x8] sm:$0xff]
    %v71 = vadd.f32 %v69, %v67
    %v72 = vadd.f32 %v70, %v68
    %vm73 = vcmask 7168
    %74 = vst.msk [vmem:[#allocation2] sm:$0xff] %vm73, %v71
    %75 = vst.msk [vmem:[#allocation2 + $0x8] sm:$0xff] %vm73, %v72
    // Predicated region
    $region14: #{tpu_custom_call.1} parent=1 // pred_check
      %p76 = pneg %p23
    $region15: #{tpu_custom_call.1} parent=1 // pred_check_branch
      %78 = sbr.rel (%p76) target = $region17
    $region16: #{tpu_custom_call.1} parent=1 // pred_region
      %v79 = vld [vmem:[#allocation2] sm:$0xff]
      %v80 = vld [vmem:[#allocation2 + $0x8] sm:$0xff]
      %v81 = vsel %vm73, %v79, 0.0
      %v82 = vsel %vm73, %v80, 0.0
      %v83 = vadd.f32 %v81, %v82
      %v84 = vrot.slane %v83, 4
      %v85 = vadd.f32 %v83, %v84
      %v86 = vrot.slane %v85, 2
      %v87 = vadd.f32 %v85, %v86
      %v88 = vrot.slane %v87, 1
      %v89 = vadd.f32 %v87, %v88
      %v90 = vmul.f32 %v89, 0.0625
      %vm91 = vcmask 0
      %92 = vst.msk [vmem:[#allocation6] sm:$0x1] %vm91, %v90
    $region17: #{tpu_custom_call.1} parent=1 // pred_fallthru
      _
    // Predicated region
    $region18: #{tpu_custom_call.1} parent=1 // pred_check
      _
    $region19: #{tpu_custom_call.1} parent=1 // pred_check_branch
      %94 = sbr.rel (0) target = $region21
    $region20: #{tpu_custom_call.1} parent=1 // pred_region
      %s96 = ssub.s32 16, 16
      %97 = vsyncadd [#allocation5], %s96
      %s99 = sshll.u32 [#allocation6], 4
      %s100 = int_to_ptr.vmem [resolvable:$true] %s99
      %102 = dma.vmem_to_hbm [thread:$0]  %s100, 16, %s1, [#allocation5]
    $region21: #{tpu_custom_call.1} parent=1 // pred_fallthru
      _
    // Predicated region
    $region22: #{tpu_custom_call.1} parent=1 // pred_check
      _
    $region23: #{tpu_custom_call.1} parent=1 // pred_check_branch
      %104 = sbr.rel (0) target = $region25
    $region24: #{tpu_custom_call.1} parent=1 // pred_region
      %105 = dma.done [#allocation5], 16
    $region25: #{tpu_custom_call.1} parent=1 // pred_fallthru
      _
    %106 = vsyncpa [#allocation4], 1
    %107 = vsyncpa [#allocation5], 1

</llo_original>
